<compile_context>
chip_gen: v7x
topology: tpu7x:2x2x1
jax: 0.10.0
libtpu: 0.0.40
codegen_flags: <defaults>
</compile_context>

<pallas_src>
import functools

import jax
import jax.numpy as jnp
from jax.experimental import pallas as pl
from jax.experimental.pallas import tpu as pltpu


def _round_up(n, m):
    return ((n + m - 1) // m) * m


def _cdiv(a, b):
    return -(-a // b)


# ---------------------------------------------------------------------------
# Kernel body
# ---------------------------------------------------------------------------
def _biaffine_kernel(x_ref, yt_ref, w_ref, o_ref, *, ob, cp, dyp):
    """One (batch, channel-block, Sx-tile, Sy-tile) grid step.

    x_ref : (1, SX_T, Dxp)      bf16
    yt_ref: (1, Dyp, SY_T)      bf16  (y pre-transposed in the wrapper)
    w_ref : (1, Dxp, OB*Dyp)    bf16  (OB output channels folded into N)
    o_ref : (1, OB, SX_T, SY_T) out_dtype
    """
    x = x_ref[0]                                       # (SX_T, Dxp)
    yt = yt_ref[0]                                     # (Dyp, SY_T)
    c = 0
    while c < ob:                                      # static python unroll
        step = min(cp, ob - c)
        # First MXU matmul for `step` channels at once (keeps N >= 256 on the
        # 256-wide v6e/v7x MXU when Dyp == 128) WITHOUT materializing the full
        # OB-wide f32 intermediate — live scratch is only SX_T x (step*Dyp).
        wg = w_ref[0, :, c * dyp:(c + step) * dyp]     # (Dxp, step*Dyp)
        xw = jnp.dot(x, wg, preferred_element_type=jnp.float32)
        xw = xw.astype(jnp.bfloat16)
        for j in range(step):
            chunk = xw[:, j * dyp:(j + 1) * dyp]       # (SX_T, Dyp)
            # Plain (M,K)x(K,N) dot — y was transposed once in the wrapper, so
            # no per-grid-step XLU transpose can be emitted here.
            s = jnp.dot(chunk, yt, preferred_element_type=jnp.float32)
            o_ref[0, c + j] = s.astype(o_ref.dtype)
        c += step


# ---------------------------------------------------------------------------
# Hardware / capability queries
# ---------------------------------------------------------------------------
def _vmem_capacity_bytes():
    try:
        cap = getattr(pltpu.get_tpu_info(), "vmem_capacity_bytes", None)
        if cap:
            return int(cap)
    except Exception:
        pass
    return 64 << 20  # conservative (v7x per-TC) fallback


_SINGLE_BUFFER_OK = None


def _single_buffering_supported():
    """Probe once whether pl.Buffered(buffer_count=1) is accepted by pallas_call."""
    global _SINGLE_BUFFER_OK
    if _SINGLE_BUFFER_OK is None:
        try:
            def _k(x_ref, o_ref):
                o_ref[...] = x_ref[...]
            probe = pl.pallas_call(
                _k,
                out_shape=jax.ShapeDtypeStruct((8, 128), jnp.float32),
                grid=(1,),
                in_specs=[pl.BlockSpec((8, 128), lambda i: (0, 0),
                                       pipeline_mode=pl.Buffered(buffer_count=1))],
                out_specs=pl.BlockSpec((8, 128), lambda i: (0, 0)),
            )(jnp.zeros((8, 128), jnp.float32))
            jax.block_until_ready(probe)
            _SINGLE_BUFFER_OK = True
        except Exception:
            _SINGLE_BUFFER_OK = False
    return _SINGLE_BUFFER_OK


# ---------------------------------------------------------------------------
# VMEM-aware tile / grid-order selection
# ---------------------------------------------------------------------------
def _select_config(B, Sx, Sy, n_out, Dxp, Dyp, out_isz, budget, single_buf_ok):
    # Nominal channel block: minimize padding waste while keeping <= 8 channels.
    ob = _cdiv(n_out, _cdiv(n_out, 8))
    sx_t = min(_round_up(max(Sx, 1), 16), 512)       # multiple of 16 (bf16 sublanes)
    sy_t = min(_round_up(max(Sy, 1), 128), 2048)     # multiple of 128 (lane-dense out)
    force_w_res = False

    def build(sx_t, sy_t, ob, force_w_res):
        cp = min(ob, max(1, 256 // Dyp))             # channels per first-matmul group
        num_ob = _cdiv(n_out, ob)
        n_out_pad = num_ob * ob
        sx_p = _round_up(Sx, sx_t)
        sy_p = _round_up(Sy, sy_t)
        num_sx = sx_p // sx_t
        num_sy = sy_p // sy_t
        # Grid-order choice: W resident across Sx tiles iff re-reading x across
        # channel blocks is cheaper than re-reading W across Sx tiles.
        x_total = sx_p * Dxp * 2
        w_total = n_out_pad * Dxp * Dyp * 2
        w_res = force_w_res or ((num_ob - 1) * x_total <= (num_sx - 1) * w_total)
        w_bufs = 1 if (w_res and single_buf_ok) else 2
        y_bufs = 1 if (num_sy == 1 and single_buf_ok) else 2
        est = (2 * sx_t * Dxp * 2                     # x block, double buffered
               + y_bufs * Dyp * sy_t * 2              # yT block
               + w_bufs * Dxp * ob * Dyp * 2          # W block
               + 2 * ob * sx_t * sy_t * out_isz       # out block, double buffered
               + sx_t * cp * Dyp * 6                  # xw (f32 + bf16 copy)
               + sx_t * sy_t * 4)                     # per-channel f32 score tile
        return dict(ob=ob, cp=cp, num_ob=num_ob, n_out_pad=n_out_pad,
                    sx_t=sx_t, sy_t=sy_t, sx_p=sx_p, sy_p=sy_p,
                    num_sx=num_sx, num_sy=num_sy, w_resident=w_res, est=est)

    cfg = build(sx_t, sy_t, ob, force_w_res)
    while cfg["est"] > budget:
        if sy_t > 512:
            sy_t = max(512, _round_up(sy_t // 2, 128))
        elif sx_t > 128:
            sx_t = max(128, _round_up(sx_t // 2, 16))
        elif (not force_w_res) and (not cfg["w_resident"]):
            force_w_res = True                        # frees one W buffer
        elif ob > 1 and ob * Dyp > 256:
            ob = max(1, ob // 2)
        elif sy_t > 128:
            sy_t = max(128, _round_up(sy_t // 2, 128))
        elif sx_t > 16:
            sx_t = max(16, _round_up(sx_t // 2, 16))
        elif ob > 1:
            ob = max(1, ob // 2)
        else:
            break                                     # minimal config; best effort
        cfg = build(sx_t, sy_t, ob, force_w_res)

    # v7x has 2 TensorCores sharded over the parallel grid axes; make sure a
    # tiny problem still produces >= 2 grid blocks so both cores get work.
    if B * cfg["num_ob"] * cfg["num_sx"] * cfg["num_sy"] < 2 and cfg["sx_t"] > 16:
        alt = build(max(16, _round_up(cfg["sx_t"] // 2, 16)), sy_t, ob, force_w_res)
        if alt["num_sx"] > cfg["num_sx"] and alt["est"] <= max(budget, cfg["est"]):
            cfg = alt
    return cfg


# ---------------------------------------------------------------------------
# Wrapper-side data preparation
# ---------------------------------------------------------------------------
def _augment_and_pad(a, use_bias, s_pad, d_pad, n_in):
    """Fuse the ones-concat with zero padding of the feature dim, pad the
    sequence dim, cast to bf16.  Exact: padded W rows/cols are zero."""
    B, S, _ = a.shape
    extra_d = d_pad - n_in
    if extra_d > 0:
        pad = jnp.zeros((B, S, extra_d), dtype=a.dtype)
        if use_bias:
            pad = pad.at[..., 0].set(jnp.asarray(1, dtype=a.dtype))
        a = jnp.concatenate([a, pad], axis=-1)
    if s_pad > S:
        a = jnp.pad(a, ((0, 0), (0, s_pad - S), (0, 0)))
    return a.astype(jnp.bfloat16)


def _pack_weight(weight, Dx, Dy, Dxp, Dyp, ob):
    """Zero-pad W to (n_out_pad, Dxp, Dyp) and fold `ob` channels into the N dim."""
    n_out = weight.shape[0]
    num_ob = _cdiv(n_out, ob)
    n_out_pad = num_ob * ob
    wp = jnp.pad(weight, ((0, n_out_pad - n_out), (0, Dxp - Dx), (0, Dyp - Dy)))
    w2 = (wp.reshape(num_ob, ob, Dxp, Dyp)
            .transpose(0, 2, 1, 3)
            .reshape(num_ob, Dxp, ob * Dyp)
            .astype(jnp.bfloat16))
    return w2


# ---------------------------------------------------------------------------
# Public module-like wrapper
# ---------------------------------------------------------------------------
class BiaffinePallas:
    """Biaffine(n_in, n_out, bias_x, bias_y) forward pass on TPU via Pallas.

    Weight preprocessing (pad + channel fold + bf16 cast) is done once here
    and cached — it is hoisted out of the per-call path.
    """

    def __init__(self, weight, bias_x=True, bias_y=True,
                 out_dtype=jnp.float32, channels_last=True):
        self.weight = jnp.asarray(weight)
        self.n_out, self.Dx, self.Dy = self.weight.shape
        self.bias_x, self.bias_y = bias_x, bias_y
        self.n_in = self.Dx - int(bias_x)
        assert self.Dy - int(bias_y) == self.n_in, "inconsistent weight shape"
        self.out_dtype = out_dtype          # use jnp.bfloat16 for a mem-bound win
        self.channels_last = channels_last  # False skips the PyTorch-layout permute
        self.Dxp = _round_up(self.Dx, 128)
        self.Dyp = _round_up(self.Dy, 128)
        self._w_cache = {}                  # ob -> packed weight

    def _packed_weight(self, ob):
        w2 = self._w_cache.get(ob)
        if w2 is None:
            w2 = _pack_weight(self.weight, self.Dx, self.Dy, self.Dxp, self.Dyp, ob)
            self._w_cache[ob] = w2
        return w2

    def __call__(self, x, y):
        B, Sx, n_in = x.shape
        By, Sy, n_in_y = y.shape
        assert B == By and n_in == self.n_in and n_in_y == self.n_in
        Dxp, Dyp = self.Dxp, self.Dyp
        out_isz = jnp.dtype(self.out_dtype).itemsize

        single_buf_ok = _single_buffering_supported()
        cap = _vmem_capacity_bytes()
        budget = int(cap * 0.8)             # ~51 MiB on v7x, ~102 MiB on v5e/v6e
        cfg = _select_config(B, Sx, Sy, self.n_out, Dxp, Dyp, out_isz,
                             budget, single_buf_ok)
        ob, cp = cfg["ob"], cfg["cp"]
        sx_t, sy_t = cfg["sx_t"], cfg["sy_t"]
        sx_p, sy_p = cfg["sx_p"], cfg["sy_p"]
        num_ob, num_sx, num_sy = cfg["num_ob"], cfg["num_sx"], cfg["num_sy"]
        n_out_pad = cfg["n_out_pad"]

        # Inputs: fused bias-concat + feature/seq zero-pad, bf16 cast.
        x_p = _augment_and_pad(x, self.bias_x, sx_p, Dxp, n_in)   # (B, Sx_p, Dxp)
        y_p = _augment_and_pad(y, self.bias_y, sy_p, Dyp, n_in)   # (B, Sy_p, Dyp)
        y_t = jnp.swapaxes(y_p, 1, 2)                              # (B, Dyp, Sy_p), one-time
        w2 = self._packed_weight(ob)                               # (num_ob, Dxp, ob*Dyp)

        kernel = functools.partial(_biaffine_kernel, ob=ob, cp=cp, dyp=Dyp)

        x_blk = (1, sx_t, Dxp)
        y_blk = (1, Dyp, sy_t)
        w_blk = (1, Dxp, ob * Dyp)
        o_blk = (1, ob, sx_t, sy_t)
        single_kw = ({"pipeline_mode": pl.Buffered(buffer_count=1)}
                     if single_buf_ok else {})
        y_kw = dict(single_kw) if num_sy == 1 else {}

        if cfg["w_resident"]:
            # W stays resident across Sx (and Sy) tiles; single-buffered.
            grid = (B, num_ob, num_sx, num_sy)
            x_spec = pl.BlockSpec(x_blk, lambda b, o, s, t: (b, s, 0))
            y_spec = pl.BlockSpec(y_blk, lambda b, o, s, t: (b, 0, t), **y_kw)
            w_spec = pl.BlockSpec(w_blk, lambda b, o, s, t: (o, 0, 0), **single_kw)
            o_spec = pl.BlockSpec(o_blk, lambda b, o, s, t: (b, o, s, t))
        else:
            # x stays resident across channel blocks; W double-buffered.
            grid = (B, num_sx, num_ob, num_sy)
            x_spec = pl.BlockSpec(x_blk, lambda b, s, o, t: (b, s, 0))
            y_spec = pl.BlockSpec(y_blk, lambda b, s, o, t: (b, 0, t), **y_kw)
            w_spec = pl.BlockSpec(w_blk, lambda b, s, o, t: (o, 0, 0))
            o_spec = pl.BlockSpec(o_blk, lambda b, s, o, t: (b, o, s, t))

        vmem_limit = int(min(cap, max(32 << 20,
                                      cfg["est"] + max(cfg["est"] // 4, 8 << 20))))

        # Cost estimate reflecting actual HBM traffic under the chosen order.
        flops = (2 * B * sx_p * Dxp * n_out_pad * Dyp
                 + 2 * B * n_out_pad * sx_p * Dyp * sy_p)
        if cfg["w_resident"]:
            x_reads = B * num_ob * sx_p * Dxp * 2
            w_reads = B * n_out_pad * Dxp * Dyp * 2
        else:
            x_reads = B * sx_p * Dxp * 2
            w_reads = B * num_sx * n_out_pad * Dxp * Dyp * 2
        y_factor = 1 if num_sy == 1 else num_ob * num_sx
        y_reads = B * y_factor * Dyp * sy_p * 2
        out_writes = B * n_out_pad * sx_p * sy_p * out_isz
        cost = pl.CostEstimate(flops=flops, transcendentals=0,
                               bytes_accessed=x_reads + w_reads + y_reads + out_writes)

        out_padded = pl.pallas_call(
            kernel,
            out_shape=jax.ShapeDtypeStruct((B, n_out_pad, sx_p, sy_p), self.out_dtype),
            grid_spec=pltpu.PrefetchScalarGridSpec(
                num_scalar_prefetch=0,
                grid=grid,
                in_specs=[x_spec, y_spec, w_spec],
                out_specs=o_spec,
            ),
            compiler_params=pltpu.CompilerParams(
                dimension_semantics=("parallel",) * 4,
                vmem_limit_bytes=vmem_limit),
            cost_estimate=cost,
        )(x_p, y_t, w2)

        out = out_padded
        if n_out_pad != self.n_out or sx_p != Sx or sy_p != Sy:
            out = out[:, :self.n_out, :Sx, :Sy]
        if self.channels_last:
            # PyTorch layout (B, Sx, Sy, n_out).  This permute is a full HBM
            # round-trip; for the hot path prefer channels_last=False and consume
            # the lane-dense (B, n_out, Sx, Sy) layout directly.
            out = jnp.transpose(out, (0, 2, 3, 1))
        return out


def biaffine_pallas(x, y, weight, bias_x=True, bias_y=True,
                    out_dtype=jnp.float32, channels_last=True):
    """One-shot functional wrapper (re-packs W each call; prefer BiaffinePallas)."""
    return BiaffinePallas(weight, bias_x=bias_x, bias_y=bias_y,
                          out_dtype=out_dtype, channels_last=channels_last)(x, y)


# ---------------------------------------------------------------------------
# Reference / init helpers
# ---------------------------------------------------------------------------
def biaffine_reference(x, y, weight, bias_x=True, bias_y=True):
    if bias_x:
        x = jnp.concatenate([x, jnp.ones_like(x[..., :1])], axis=-1)
    if bias_y:
        y = jnp.concatenate([y, jnp.ones_like(y[..., :1])], axis=-1)
    s = jnp.einsum('bxi,oij,byj->boxy', x, weight, y)
    return jnp.transpose(s, (0, 2, 3, 1))


def make_weight(key, n_in, n_out, bias_x=True, bias_y=True):
    """Deterministic xavier_normal_-style init matching the PyTorch shapes."""
    dx = n_in + int(bias_x)
    dy = n_in + int(bias_y)
    fan_in = dx * dy
    fan_out = n_out * dy
    std = (2.0 / (fan_in + fan_out)) ** 0.5
    return std * jax.random.normal(key, (n_out, dx, dy), dtype=jnp.float32)


if __name__ == "__main__":
    key = jax.random.PRNGKey(0)
    kx, ky, kw1, kw2 = jax.random.split(key, 4)

    B, Sx, Sy, n_in, n_out = 2, 8, 8, 32, 2
    x = jax.random.normal(kx, (B, Sx, n_in), dtype=jnp.float32)
    y = jax.random.normal(ky, (B, Sy, n_in), dtype=jnp.float32)

    # Case 1: module defaults (bias_x=bias_y=True), prepacked weight path.
    w1 = make_weight(kw1, n_in, n_out, bias_x=True, bias_y=True)
    mod = BiaffinePallas(w1, bias_x=True, bias_y=True)
    out = mod(x, y)
    jax.block_until_ready(out)
    ref = biaffine_reference(x, y, w1, bias_x=True, bias_y=True)
    assert out.shape == (B, Sx, Sy, n_out), out.shape
    # bf16 MXU inputs (f32 accumulation) -> loosened tolerance vs the f32 einsum.
    assert jnp.allclose(out, ref, atol=5e-2, rtol=5e-2), "case 1 mismatch"

    # Case 2: odd n_out (exercises the channel-group tail) and bias_y=False.
    n_out2 = 5
    w2 = make_weight(kw2, n_in, n_out2, bias_x=True, bias_y=False)
    out2 = biaffine_pallas(x, y, w2, bias_x=True, bias_y=False)
    jax.block_until_ready(out2)
    ref2 = biaffine_reference(x, y, w2, bias_x=True, bias_y=False)
    assert out2.shape == (B, Sx, Sy, n_out2), out2.shape
    assert jnp.allclose(out2, ref2, atol=5e-2, rtol=5e-2), "case 2 mismatch"

    print("KERNEL_OK")
</pallas_src>

<mosaic_0001>
module attributes {stable_mosaic.version = 11 : i64} {
  func.func @_k(%arg0: i32, %arg1: memref<8x128xf32, #tpu.memory_space<vmem>>, %arg2: memref<8x128xf32, #tpu.memory_space<vmem>>) attributes {dimension_semantics = [#tpu.dimension_semantics<arbitrary>], iteration_bounds = array<i64: 1>, scalar_prefetch = 0 : i64, scratch_operands = 0 : i64, tpu.core_type = #tpu.core_type<tc>, window_params = [{pipeline_mode = #tpu.pipeline_mode<synchronous>, transform_indices = @transform_0, window_bounds = array<i64: 8, 128>}, {pipeline_mode = #tpu.pipeline_mode<synchronous>, transform_indices = @transform_1, window_bounds = array<i64: 8, 128>}]} {
    %c0 = arith.constant 0 : index
    %c0_0 = arith.constant 0 : index
    %0 = vector.load %arg1[%c0, %c0_0] : memref<8x128xf32, #tpu.memory_space<vmem>>, vector<8x128xf32>
    %c0_1 = arith.constant 0 : index
    %c0_2 = arith.constant 0 : index
    %1 = vector.load %arg2[%c0_1, %c0_2] : memref<8x128xf32, #tpu.memory_space<vmem>>, vector<8x128xf32>
    tpu.vector_store %arg2[%c0_1, %c0_2], %0 {strides = array<i32>} : memref<8x128xf32, #tpu.memory_space<vmem>>, vector<8x128xf32>,
    return
  }
  func.func @transform_0(%arg0: i32) -> (i32, i32) {
    %c0_i32 = arith.constant 0 : i32
    %c0_i32_0 = arith.constant 0 : i32
    %c0_i32_1 = arith.constant 0 : i32
    return %c0_i32, %c0_i32_0 : i32, i32
  }
  func.func @transform_1(%arg0: i32) -> (i32, i32) {
    %c0_i32 = arith.constant 0 : i32
    %c0_i32_0 = arith.constant 0 : i32
    %c0_i32_1 = arith.constant 0 : i32
    return %c0_i32, %c0_i32_0 : i32, i32
  }
}

module attributes {stable_mosaic.version = 11 : i64} {
  func.func @_biaffine_kernel(%arg0: i32, %arg1: i32, %arg2: i32, %arg3: i32, %arg4: memref<1x16x128xbf16, #tpu.memory_space<vmem>>, %arg5: memref<1x128x128xbf16, #tpu.memory_space<vmem>>, %arg6: memref<1x128x256xbf16, #tpu.memory_space<vmem>>, %arg7: memref<1x2x16x128xf32, #tpu.memory_space<vmem>>) attributes {dimension_semantics = [#tpu.dimension_semantics<parallel>, #tpu.dimension_semantics<parallel>, #tpu.dimension_semantics<parallel>, #tpu.dimension_semantics<parallel>], iteration_bounds = array<i64: 2, 1, 1, 1>, scalar_prefetch = 0 : i64, scratch_operands = 0 : i64, tpu.core_type = #tpu.core_type<tc>, window_params = [{transform_indices = @transform_0, window_bounds = array<i64: 1, 16, 128>}, {transform_indices = @transform_1, window_bounds = array<i64: 1, 128, 128>}, {transform_indices = @transform_2, window_bounds = array<i64: 1, 128, 256>}, {transform_indices = @transform_3, window_bounds = array<i64: 1, 2, 16, 128>}]} {
    %c0 = arith.constant 0 : index
    %c0_0 = arith.constant 0 : index
    %c0_1 = arith.constant 0 : index
    %0 = vector.load %arg4[%c0, %c0_0, %c0_1] : memref<1x16x128xbf16, #tpu.memory_space<vmem>>, vector<1x16x128xbf16>
    %1 = vector.shape_cast %0 : vector<1x16x128xbf16> to vector<16x128xbf16>
    %c0_2 = arith.constant 0 : index
    %c0_3 = arith.constant 0 : index
    %c0_4 = arith.constant 0 : index
    %2 = vector.load %arg5[%c0_2, %c0_3, %c0_4] : memref<1x128x128xbf16, #tpu.memory_space<vmem>>, vector<1x128x128xbf16>
    %3 = vector.shape_cast %2 : vector<1x128x128xbf16> to vector<128x128xbf16>
    %c0_5 = arith.constant 0 : index
    %c0_6 = arith.constant 0 : index
    %c0_7 = arith.constant 0 : index
    %4 = vector.load %arg6[%c0_5, %c0_6, %c0_7] : memref<1x128x256xbf16, #tpu.memory_space<vmem>>, vector<1x128x256xbf16>
    %5 = vector.shape_cast %4 : vector<1x128x256xbf16> to vector<128x256xbf16>
    %cst = arith.constant dense<0.000000e+00> : vector<16x256xf32>
    %6 = tpu.matmul %1, %5, %cst {dimension_numbers = #tpu.dot_dimension_numbers<[1], [0], [0], [1], [0, 0, 1, 1], [], []>} : vector<16x128xbf16>, vector<128x256xbf16>, vector<16x256xf32> -> vector<16x256xf32>
    %7 = arith.truncf %6 : vector<16x256xf32> to vector<16x256xbf16>
    %8 = vector.extract_strided_slice %7 {offsets = [0, 0], sizes = [16, 128], strides = [1, 1]} : vector<16x256xbf16> to vector<16x128xbf16>
    %cst_8 = arith.constant dense<0.000000e+00> : vector<16x128xf32>
    %9 = tpu.matmul %8, %3, %cst_8 {dimension_numbers = #tpu.dot_dimension_numbers<[1], [0], [0], [1], [0, 0, 1, 1], [], []>} : vector<16x128xbf16>, vector<128x128xbf16>, vector<16x128xf32> -> vector<16x128xf32>
    %c0_9 = arith.constant 0 : index
    %c0_10 = arith.constant 0 : index
    %c0_11 = arith.constant 0 : index
    %c0_12 = arith.constant 0 : index
    %10 = vector.load %arg7[%c0_9, %c0_10, %c0_11, %c0_12] : memref<1x2x16x128xf32, #tpu.memory_space<vmem>>, vector<1x1x16x128xf32>
    %11 = vector.shape_cast %10 : vector<1x1x16x128xf32> to vector<16x128xf32>
    %12 = vector.shape_cast %9 : vector<16x128xf32> to vector<1x1x16x128xf32>
    tpu.vector_store %arg7[%c0_9, %c0_10, %c0_11, %c0_12], %12 {strides = array<i32>} : memref<1x2x16x128xf32, #tpu.memory_space<vmem>>, vector<1x1x16x128xf32>,
    %13 = vector.extract_strided_slice %7 {offsets = [0, 128], sizes = [16, 128], strides = [1, 1]} : vector<16x256xbf16> to vector<16x128xbf16>
    %cst_13 = arith.constant dense<0.000000e+00> : vector<16x128xf32>
    %14 = tpu.matmul %13, %3, %cst_13 {dimension_numbers = #tpu.dot_dimension_numbers<[1], [0], [0], [1], [0, 0, 1, 1], [], []>} : vector<16x128xbf16>, vector<128x128xbf16>, vector<16x128xf32> -> vector<16x128xf32>
    %c0_14 = arith.constant 0 : index
    %c1 = arith.constant 1 : index
    %c0_15 = arith.constant 0 : index
    %c0_16 = arith.constant 0 : index
    %15 = vector.load %arg7[%c0_14, %c1, %c0_15, %c0_16] : memref<1x2x16x128xf32, #tpu.memory_space<vmem>>, vector<1x1x16x128xf32>
    %16 = vector.shape_cast %15 : vector<1x1x16x128xf32> to vector<16x128xf32>
    %17 = vector.shape_cast %14 : vector<16x128xf32> to vector<1x1x16x128xf32>
    tpu.vector_store %arg7[%c0_14, %c1, %c0_15, %c0_16], %17 {strides = array<i32>} : memref<1x2x16x128xf32, #tpu.memory_space<vmem>>, vector<1x1x16x128xf32>,
    return
  }
  func.func @transform_0(%arg0: i32, %arg1: i32, %arg2: i32, %arg3: i32) -> (i32, i32, i32) {
    %c0_i32 = arith.constant 0 : i32
    %c0_i32_0 = arith.constant 0 : i32
    return %arg0, %arg2, %c0_i32 : i32, i32, i32
  }
  func.func @transform_1(%arg0: i32, %arg1: i32, %arg2: i32, %arg3: i32) -> (i32, i32, i32) {
    %c0_i32 = arith.constant 0 : i32
    %c0_i32_0 = arith.constant 0 : i32
    return %arg0, %c0_i32, %arg3 : i32, i32, i32
  }
  func.func @transform_2(%arg0: i32, %arg1: i32, %arg2: i32, %arg3: i32) -> (i32, i32, i32) {
    %c0_i32 = arith.constant 0 : i32
    %c0_i32_0 = arith.constant 0 : i32
    %c0_i32_1 = arith.constant 0 : i32
    return %arg1, %c0_i32, %c0_i32_0 : i32, i32, i32
  }
  func.func @transform_3(%arg0: i32, %arg1: i32, %arg2: i32, %arg3: i32) -> (i32, i32, i32, i32) {
    %c0_i32 = arith.constant 0 : i32
    return %arg0, %arg1, %arg2, %arg3 : i32, i32, i32, i32
  }
}

</mosaic_0001>

<llo_original>
// kernel: tpu_custom_call.1
$region0: #{tpu_custom_call.1}
  #allocation0 [shape = 'u32[]', space=smem, size = 0x4, offset = 0x4, fixed_abs, tag = 'smem constant byte address 0x4 - core index']
  #allocation1 [shape = 'u32[144,128]{1,0:T(1,128)}', space=vmem, size = 0x12000, scoped, tag = 'internal scratch']
  %s0 = inlined_call_operand.hbm [shape: f32[8,128], index: 0, kind: input, shape index: {}]
  %s1 = inlined_call_operand.hbm [shape: f32[8,128], index: 1, kind: output, shape index: {}]
  %s2 = sld [smem:[#allocation0]]
  $region18: #{tpu_custom_call.1} parent=0
    _
  %s4 = ssub.s32 1, %s2
  %s5 = scalar_select 0, %s4, %s2
  $region1: #{tpu_custom_call.1} parent=0
    #allocation2 [shape = 'u8[4096]{0}', space=vmem, size = 0x1000, scoped, tag = 'input window, operand 0, single buffered']
    #allocation3 [shape = 's32[1]{0}', space=sflag, size = 0x4, scoped, tag = 'scoped memory for tpu_custom_call.1']
    #allocation4 [shape = 's32[1]{0}', space=sflag, size = 0x4, scoped, tag = 'scoped memory for tpu_custom_call.1']
    #allocation5 [shape = 'u8[4096]{0}', space=vmem, size = 0x1000, scoped, tag = 'output window, operand 0, single buffered']
    %6 = vsyncpa [#allocation3], 0
    %7 = vsyncpa [#allocation4], 0
    // Predicated region
    $region2: #{tpu_custom_call.1} parent=1 // pred_check
      _
    $region3: #{tpu_custom_call.1} parent=1 // pred_check_branch
      %9 = sbr.rel (0) target = $region5
    $region4: #{tpu_custom_call.1} parent=1 // pred_region
      %s11 = ssub.s32 128, 128
      %12 = vsyncadd [#allocation3], %s11
      %s14 = sshll.u32 [#allocation2], 4
      %s15 = int_to_ptr.vmem [resolvable:$true] %s14
      %17 = dma.hbm_to_vmem [thread:$0]  %s0, 128, %s15, [#allocation3]
    $region5: #{tpu_custom_call.1} parent=1 // pred_fallthru
      _
    // Predicated region
    $region6: #{tpu_custom_call.1} parent=1 // pred_check
      _
    $region7: #{tpu_custom_call.1} parent=1 // pred_check_branch
      %19 = sbr.rel (0) target = $region9
    $region8: #{tpu_custom_call.1} parent=1 // pred_region
      %20 = dma.done [#allocation3], 128
    $region9: #{tpu_custom_call.1} parent=1 // pred_fallthru
      _
    %v21 = vld [vmem:[#allocation2] sm:$0xff]
    %22 = vst [vmem:[#allocation5] sm:$0xff] %v21
    // Predicated region
    $region10: #{tpu_custom_call.1} parent=1 // pred_check
      _
    $region11: #{tpu_custom_call.1} parent=1 // pred_check_branch
      %24 = sbr.rel (0) target = $region13
    $region12: #{tpu_custom_call.1} parent=1 // pred_region
      %s26 = ssub.s32 128, 128
      %27 = vsyncadd [#allocation4], %s26
      %s29 = sshll.u32 [#allocation5], 4
      %s30 = int_to_ptr.vmem [resolvable:$true] %s29
      %32 = dma.vmem_to_hbm [thread:$0]  %s30, 128, %s1, [#allocation4]
    $region13: #{tpu_custom_call.1} parent=1 // pred_fallthru
      _
    // Predicated region
    $region14: #{tpu_custom_call.1} parent=1 // pred_check
      _
    $region15: #{tpu_custom_call.1} parent=1 // pred_check_branch
      %34 = sbr.rel (0) target = $region17
    $region16: #{tpu_custom_call.1} parent=1 // pred_region
      %35 = dma.done [#allocation4], 128
    $region17: #{tpu_custom_call.1} parent=1 // pred_fallthru
      _
    %36 = vsyncpa [#allocation3], 1
    %37 = vsyncpa [#allocation4], 1

// kernel: tpu_custom_call.1
$region0: #{tpu_custom_call.1}
  #allocation0 [shape = 'u32[]', space=smem, size = 0x4, offset = 0x4, fixed_abs, tag = 'smem constant byte address 0x4 - core index']
  #allocation1 [shape = 'u32[144,128]{1,0:T(1,128)}', space=vmem, size = 0x12000, scoped, tag = 'internal scratch']
  %s0 = inlined_call_operand.hbm [shape: bf16[2,16,128], index: 0, kind: input, shape index: {}]
  %s1 = inlined_call_operand.hbm [shape: bf16[2,128,128], index: 1, kind: input, shape index: {}]
  %s2 = inlined_call_operand.hbm [shape: bf16[1,128,256], index: 2, kind: input, shape index: {}]
  %s3 = inlined_call_operand.hbm [shape: f32[2,2,16,128], index: 3, kind: output, shape index: {}]
  %s4 = sld [smem:[#allocation0]]
  $region57: #{tpu_custom_call.1} parent=0
    _
  %s6 = ssub.s32 1, %s4
  %s7 = scalar_select 0, %s6, %s4
  $region1: #{tpu_custom_call.1} parent=0
    #allocation2 [shape = 'u8[8192]{0}', space=vmem, size = 0x2000, scoped, tag = 'input window, operand 0']
    #allocation3 [shape = 's32[2]{0}', space=sflag, size = 0x8, scoped, tag = 'scoped memory for tpu_custom_call.1']
    #allocation4 [shape = 's32[2]{0}', space=sflag, size = 0x8, scoped, tag = 'scoped memory for tpu_custom_call.1']
    #allocation5 [shape = 'u8[65536]{0}', space=vmem, size = 0x10000, scoped, tag = 'input window, operand 1']
    #allocation6 [shape = 's32[2]{0}', space=sflag, size = 0x8, scoped, tag = 'scoped memory for tpu_custom_call.1']
    #allocation7 [shape = 'u8[65536]{0}', space=vmem, size = 0x10000, scoped, tag = 'input window, operand 2, single buffered']
    #allocation8 [shape = 'u8[32768]{0}', space=vmem, size = 0x8000, scoped, tag = 'output window, operand 0']
    %8 = vsyncpa [#allocation3], 0
    %s9 = scalar_lea.sflag [#allocation3], 1
    %10 = vsyncpa %s9, 0
    %11 = vsyncpa [#allocation6], 0
    %s12 = scalar_lea.sflag [#allocation6], 1
    %13 = vsyncpa %s12, 0
    %14 = vsyncpa [#allocation4], 0
    %s15 = scalar_lea.sflag [#allocation4], 1
    %16 = vsyncpa %s15, 0
    loop: start=0, step=1, limit=4
    $region2: #{tpu_custom_call.1} parent=1 // loop_pre_header
      _
    $region3: #{tpu_custom_call.1} parent=1 // loop_header
      %s18 = sphi 0, %s22
      %p19 = scmp.ge.s32.totalorder %s18, 4
      %s25 = sphi 0, %s51
      %s26 = sphi 0, %s47
      %s27 = sphi 0, %s43
      %s28 = sphi 0, %s39
      %s29 = sphi 0, %s25
      %s30 = sphi 0, %s26
      %s31 = sphi 0, %s27
      %s32 = sphi 0, %s28
      %s33 = sphi 0, %s29
      %s34 = sphi 0, %s30
      %s35 = sphi 0, %s31
      %s36 = sphi 0, %s32
      %s56 = sphi 0, %s58
      %s59 = sphi 0, %s56
      %s60 = sphi 0, %s59
      %s76 = sphi 0, %s60
      %s84 = sphi 0, %s86
      %s87 = sphi 0, %s84
      %s88 = sphi 0, %s87
      %s104 = sphi 0, %s88
      %s110 = sphi 0, %s112
      %s113 = sphi 0, %s110
      %s114 = sphi 0, %s113
      %s130 = sphi 0, %s114
      %s142 = sphi 0, %s144
      %s145 = sphi 0, %s142
      %s146 = sphi 0, %s145
      %s162 = sphi 0, %s146
    $region4: #{tpu_custom_call.1} parent=1 // loop_header_branch
      %21 = sbr.rel (%p19) target = $region8
    $region5: #{tpu_custom_call.1} parent=1 // loop_body
      %s23 = ssub.s32 %s18, 1
      %s24 = ssub.s32 %s18, 2
      %s37 = sadd.s32 1, %s28
      %p38 = scmp.ge.s32.totalorder %s37, 1
      %s39 = scalar_select %p38, 0, %s37
      %s40 = sadd.s32 1, %s27
      %s41 = scalar_select %p38, %s40, %s27
      %p42 = scmp.ge.s32.totalorder %s41, 1
      %s43 = scalar_select %p42, 0, %s41
      %s44 = sadd.s32 1, %s26
      %s45 = scalar_select %p42, %s44, %s26
      %p46 = scmp.ge.s32.totalorder %s45, 1
      %s47 = scalar_select %p46, 0, %s45
      %s48 = sadd.s32 1, %s25
      %s49 = scalar_select %p46, %s48, %s25
      %p50 = scmp.ge.s32.totalorder %s49, 2
      %s51 = scalar_select %p50, 0, %s49
      %s52 = ssub.s32 %s25, %s51
      %s53 = ssub.s32 %s27, %s43
      %s54 = sor.u32 %s52, %s53
      %p55 = scmp.eq.s32.totalorder %s54, 0
      %s57 = sadd.s32 %s56, 1
      %s58 = scalar_select %p55, %s56, %s57
      %p61 = pneg %p55
      %p62 = scmp.eq.s32.totalorder %s18, 1
      %p63 = por %p61, %p62
      %p64 = scmp.ne.s32.totalorder %s56, %s59
      %p65 = scmp.eq.s32.totalorder %s18, 0
      %p66 = por %p64, %p65
      %p67 = scmp.ne.s32.totalorder %s56, %s59
      %p68 = scmp.eq.s32.totalorder %s23, 1
      %p69 = por %p67, %p68
      %p70 = scmp.ne.s32.totalorder %s59, %s60
      %p71 = scmp.eq.s32.totalorder %s23, 0
      %p72 = por %p70, %p71
      %p73 = scmp.ne.s32.totalorder %s59, %s60
      %p74 = scmp.eq.s32.totalorder %s24, 1
      %p75 = por %p73, %p74
      %p77 = scmp.ne.s32.totalorder %s60, %s76
      %p78 = scmp.eq.s32.totalorder %s24, 0
      %p79 = por %p77, %p78
      %s80 = ssub.s32 %s25, %s51
      %s81 = ssub.s32 %s28, %s39
      %s82 = sor.u32 %s80, %s81
      %p83 = scmp.eq.s32.totalorder %s82, 0
      %s85 = sadd.s32 %s84, 1
      %s86 = scalar_select %p83, %s84, %s85
      %p89 = pneg %p83
      %p90 = scmp.eq.s32.totalorder %s18, 1
      %p91 = por %p89, %p90
      %p92 = scmp.ne.s32.totalorder %s84, %s87
      %p93 = scmp.eq.s32.totalorder %s18, 0
      %p94 = por %p92, %p93
      %p95 = scmp.ne.s32.totalorder %s84, %s87
      %p96 = scmp.eq.s32.totalorder %s23, 1
      %p97 = por %p95, %p96
      %p98 = scmp.ne.s32.totalorder %s87, %s88
      %p99 = scmp.eq.s32.totalorder %s23, 0
      %p100 = por %p98, %p99
      %p101 = scmp.ne.s32.totalorder %s87, %s88
      %p102 = scmp.eq.s32.totalorder %s24, 1
      %p103 = por %p101, %p102
      %p105 = scmp.ne.s32.totalorder %s88, %s104
      %p106 = scmp.eq.s32.totalorder %s24, 0
      %p107 = por %p105, %p106
      %s108 = ssub.s32 %s26, %s47
      %p109 = scmp.eq.s32.totalorder %s108, 0
      %s111 = sadd.s32 %s110, 1
      %s112 = scalar_select %p109, %s110, %s111
      %p115 = pneg %p109
      %p116 = scmp.eq.s32.totalorder %s18, 1
      %p117 = por %p115, %p116
      %p118 = scmp.ne.s32.totalorder %s110, %s113
      %p119 = scmp.eq.s32.totalorder %s18, 0
      %p120 = por %p118, %p119
      %p121 = scmp.ne.s32.totalorder %s110, %s113
      %p122 = scmp.eq.s32.totalorder %s23, 1
      %p123 = por %p121, %p122
      %p124 = scmp.ne.s32.totalorder %s113, %s114
      %p125 = scmp.eq.s32.totalorder %s23, 0
      %p126 = por %p124, %p125
      %p127 = scmp.ne.s32.totalorder %s113, %s114
      %p128 = scmp.eq.s32.totalorder %s24, 1
      %p129 = por %p127, %p128
      %p131 = scmp.ne.s32.totalorder %s114, %s130
      %p132 = scmp.eq.s32.totalorder %s24, 0
      %p133 = por %p131, %p132
      %s134 = ssub.s32 %s25, %s51
      %s135 = ssub.s32 %s26, %s47
      %s136 = sor.u32 %s134, %s135
      %s137 = ssub.s32 %s27, %s43
      %s138 = sor.u32 %s136, %s137
      %s139 = ssub.s32 %s28, %s39
      %s140 = sor.u32 %s138, %s139
      %p141 = scmp.eq.s32.totalorder %s140, 0
      %s143 = sadd.s32 %s142, 1
      %s144 = scalar_select %p141, %s142, %s143
      %p147 = pneg %p141
      %p148 = scmp.eq.s32.totalorder %s18, 1
      %p149 = por %p147, %p148
      %p150 = scmp.ne.s32.totalorder %s142, %s145
      %p151 = scmp.eq.s32.totalorder %s18, 0
      %p152 = por %p150, %p151
      %p153 = scmp.ne.s32.totalorder %s142, %s145
      %p154 = scmp.eq.s32.totalorder %s23, 1
      %p155 = por %p153, %p154
      %p156 = scmp.ne.s32.totalorder %s145, %s146
      %p157 = scmp.eq.s32.totalorder %s23, 0
      %p158 = por %p156, %p157
      %p159 = scmp.ne.s32.totalorder %s145, %s146
      %p160 = scmp.eq.s32.totalorder %s24, 1
      %p161 = por %p159, %p160
      %p163 = scmp.ne.s32.totalorder %s146, %s162
      %p164 = scmp.eq.s32.totalorder %s24, 0
      %p165 = por %p163, %p164
      %p166 = scmp.le.s32.totalorder 1, %s18
      %p167 = scmp.lt.s32.totalorder %s18, 3
      %p168 = pnand %p166, %p167
      %p169 = pneg %p168
      // Predicated region
      $region9: #{tpu_custom_call.1} parent=5 // pred_check
        _
      $region10: #{tpu_custom_call.1} parent=5 // pred_check_branch
        %171 = sbr.rel (%p168) target = $region12
      $region11: #{tpu_custom_call.1} parent=5 // pred_region
        %s172 = ssub.s32 %s18, 1
        // Predicated region
        $region13: #{tpu_custom_call.1} parent=11 // pred_check
          %p173 = pneg %p126
        $region14: #{tpu_custom_call.1} parent=11 // pred_check_branch
          %175 = sbr.rel (%p173) target = $region16
        $region15: #{tpu_custom_call.1} parent=11 // pred_region
          %s177 = ssub.s32 2048, 2048
          %178 = vsyncadd [#allocation6], %s177
          %s179 = smul.addr %s30, 32
          %s180 = smul.addr %s179, 64
          %s181 = scalar_lea.hbm %s2, %s180
          %s182 = sshll.u32 [#allocation7], 4
          %s183 = int_to_ptr.vmem [resolvable:$true] %s182
          %188 = dma.hbm_to_vmem [thread:$0]  %s181, 2048, %s183, [#allocation6], 128, 128, 8
        $region16: #{tpu_custom_call.1} parent=11 // pred_fallthru
          _
      $region12: #{tpu_custom_call.1} parent=5 // pred_fallthru
        _
      %p189 = scmp.lt.s32.totalorder %s18, 2
      // Predicated region
      $region17: #{tpu_custom_call.1} parent=5 // pred_check
        %p190 = pneg %p189
      $region18: #{tpu_custom_call.1} parent=5 // pred_check_branch
        %192 = sbr.rel (%p190) target = $region20
      $region19: #{tpu_custom_call.1} parent=5 // pred_region
        // Predicated region
        $region21: #{tpu_custom_call.1} parent=19 // pred_check
          %p193 = pneg %p66
        $region22: #{tpu_custom_call.1} parent=19 // pred_check_branch
          %195 = sbr.rel (%p193) target = $region24
        $region23: #{tpu_custom_call.1} parent=19 // pred_region
          %s196 = sand.u32 %s56, 1
          %s197 = scalar_lea.sflag [#allocation3], %s196
          %s198 = sand.u32 %s56, 1
          %s199 = smul.addr %s198, 8
          %s200 = scalar_lea.vmem [#allocation2], %s199
          %s201 = smul.u32 2, %s27
          %s203 = ssub.s32 128, 128
          %204 = vsyncadd %s197, %s203
          %s205 = smul.addr %s25, 2
          %s206 = sadd.s32 %s201, %s205
          %s207 = smul.addr %s206, 64
          %s208 = scalar_lea.hbm %s0, %s207
          %s209 = sshll.u32 %s200, 4
          %s210 = int_to_ptr.vmem [resolvable:$true] %s209
          %215 = dma.hbm_to_vmem [thread:$0]  %s208, 128, %s210, %s197, 64, 64, 4
        $region24: #{tpu_custom_call.1} parent=19 // pred_fallthru
          _
        // Predicated region
        $region25: #{tpu_custom_call.1} parent=19 // pred_check
          %p216 = pneg %p94
        $region26: #{tpu_custom_call.1} parent=19 // pred_check_branch
          %218 = sbr.rel (%p216) target = $region28
        $region27: #{tpu_custom_call.1} parent=19 // pred_region
          %s219 = sand.u32 %s18, 1
          %s220 = scalar_lea.sflag [#allocation6], %s219
          %s221 = sand.u32 %s84, 1
          %s222 = smul.addr %s221, 64
          %s223 = scalar_lea.vmem [#allocation5], %s222
          %s225 = ssub.s32 1024, 1024
          %226 = vsyncadd %s220, %s225
          %s227 = smul.addr %s25, 16
          %s228 = sadd.s32 %s28, %s227
          %s229 = smul.addr %s228, 64
          %s230 = scalar_lea.hbm %s1, %s229
          %s231 = sshll.u32 %s223, 4
          %s232 = int_to_ptr.vmem [resolvable:$true] %s231
          %237 = dma.hbm_to_vmem [thread:$0]  %s230, 1024, %s232, %s220, 64, 64, 4
        $region28: #{tpu_custom_call.1} parent=19 // pred_fallthru
          _
      $region20: #{tpu_custom_call.1} parent=5 // pred_fallthru
        _
      %p238 = scmp.le.s32.totalorder 1, %s18
      %p239 = scmp.lt.s32.totalorder %s18, 3
      %p240 = pnand %p238, %p239
      %p241 = pneg %p240
      // Predicated region
      $region29: #{tpu_custom_call.1} parent=5 // pred_check
        _
      $region30: #{tpu_custom_call.1} parent=5 // pred_check_branch
        %243 = sbr.rel (%p240) target = $region32
      $region31: #{tpu_custom_call.1} parent=5 // pred_region
        %s244 = ssub.s32 %s18, 1
        %s245 = sand.u32 %s59, 1
        %s246 = scalar_lea.sflag [#allocation3], %s245
        %s247 = sand.u32 %s59, 1
        %s248 = smul.addr %s247, 8
        %s249 = scalar_lea.vmem [#allocation2], %s248
        // Predicated region
        $region33: #{tpu_custom_call.1} parent=31 // pred_check
          %p250 = pneg %p72
        $region34: #{tpu_custom_call.1} parent=31 // pred_check_branch
          %252 = sbr.rel (%p250) target = $region36
        $region35: #{tpu_custom_call.1} parent=31 // pred_region
          %253 = dma.done %s246, 128
        $region36: #{tpu_custom_call.1} parent=31 // pred_fallthru
          _
        %s254 = sand.u32 %s23, 1
        %s255 = scalar_lea.sflag [#allocation6], %s254
        %s256 = sand.u32 %s87, 1
        %s257 = smul.addr %s256, 64
        %s258 = scalar_lea.vmem [#allocation5], %s257
        // Predicated region
        $region37: #{tpu_custom_call.1} parent=31 // pred_check
          %p259 = pneg %p100
        $region38: #{tpu_custom_call.1} parent=31 // pred_check_branch
          %261 = sbr.rel (%p259) target = $region40
        $region39: #{tpu_custom_call.1} parent=31 // pred_region
          %262 = dma.done %s255, 1024
        $region40: #{tpu_custom_call.1} parent=31 // pred_fallthru
          _
        // Predicated region
        $region41: #{tpu_custom_call.1} parent=31 // pred_check
          %p263 = pneg %p126
        $region42: #{tpu_custom_call.1} parent=31 // pred_check_branch
          %265 = sbr.rel (%p263) target = $region44
        $region43: #{tpu_custom_call.1} parent=31 // pred_region
          %266 = dma.done [#allocation6], 2048
        $region44: #{tpu_custom_call.1} parent=31 // pred_fallthru
          _
        %s267 = sand.u32 %s59, 1
        %s268 = scalar_lea.sflag [#allocation3], %s267
        %s269 = sand.u32 %s59, 1
        %s270 = smul.addr %s269, 8
        %s271 = scalar_lea.vmem [#allocation2], %s270
        %p272 = pneg %p72
        %p273 = pneg %p69
        %s274 = sand.u32 %s23, 1
        %s275 = scalar_lea.sflag [#allocation6], %s274
        %s276 = sand.u32 %s87, 1
        %s277 = smul.addr %s276, 64
        %s278 = scalar_lea.vmem [#allocation5], %s277
        %p279 = pneg %p100
        %p280 = pneg %p97
        %p281 = pneg %p126
        %p282 = pneg %p123
        %p283 = pneg %p158
        %p284 = pneg %p155
        %s285 = sand.u32 %s145, 1
        %s286 = scalar_lea.sflag [#allocation4], %s285
        %s287 = sand.u32 %s145, 1
        %s288 = smul.addr %s287, 32
        %s289 = scalar_lea.vmem [#allocation8], %s288
        %s290 = smul.u32 2, %s31
        %s291 = smul.u32 2, %s30
        %s292 = smul.u32 2, %s31
        %v294 = vld [vmem:[%s249] sm:$0xf]
        %v295 = vld [vmem:[%s249 + $0x4] sm:$0xf]
        %v296 = vld [vmem:[%s258] sm:$0xf]
        %v297 = vld [vmem:[%s258 + $0x4] sm:$0xf]
        %v298 = vld [vmem:[%s258 + $0x8] sm:$0xf]
        %v299 = vld [vmem:[%s258 + $0xc] sm:$0xf]
        %v300 = vld [vmem:[%s258 + $0x10] sm:$0xf]
        %v301 = vld [vmem:[%s258 + $0x14] sm:$0xf]
        %v302 = vld [vmem:[%s258 + $0x18] sm:$0xf]
        %v303 = vld [vmem:[%s258 + $0x1c] sm:$0xf]
        %v304 = vld [vmem:[%s258 + $0x20] sm:$0xf]
        %v305 = vld [vmem:[%s258 + $0x24] sm:$0xf]
        %v306 = vld [vmem:[%s258 + $0x28] sm:$0xf]
        %v307 = vld [vmem:[%s258 + $0x2c] sm:$0xf]
        %v308 = vld [vmem:[%s258 + $0x30] sm:$0xf]
        %v309 = vld [vmem:[%s258 + $0x34] sm:$0xf]
        %v310 = vld [vmem:[%s258 + $0x38] sm:$0xf]
        %v311 = vld [vmem:[%s258 + $0x3c] sm:$0xf]
        %v312 = vld [vmem:[#allocation7] sm:$0xff]
        %v313 = vld [vmem:[#allocation7 + $0x8] sm:$0xff]
        %v314 = vld [vmem:[#allocation7 + $0x10] sm:$0xff]
        %v315 = vld [vmem:[#allocation7 + $0x18] sm:$0xff]
        %v316 = vld [vmem:[#allocation7 + $0x20] sm:$0xff]
        %v317 = vld [vmem:[#allocation7 + $0x28] sm:$0xff]
        %v318 = vld [vmem:[#allocation7 + $0x30] sm:$0xff]
        %v319 = vld [vmem:[#allocation7 + $0x38] sm:$0xff]
        %v320 = vld [vmem:[#allocation7 + $0x40] sm:$0xff]
        %v321 = vld [vmem:[#allocation7 + $0x48] sm:$0xff]
        %v322 = vld [vmem:[#allocation7 + $0x50] sm:$0xff]
        %v323 = vld [vmem:[#allocation7 + $0x58] sm:$0xff]
        %v324 = vld [vmem:[#allocation7 + $0x60] sm:$0xff]
        %v325 = vld [vmem:[#allocation7 + $0x68] sm:$0xff]
        %v326 = vld [vmem:[#allocation7 + $0x70] sm:$0xff]
        %v327 = vld [vmem:[#allocation7 + $0x78] sm:$0xff]
        %v330 = vunpack.c.l.b16 %v294
        %v331 = vunpack.c.l.b16 %v295
        %v332 = vpack.c.b16 %v331, %v330
        %v350 = vunpack.c.l.b16 %v312
        %v351 = vunpack.c.h.b16 %v312
        %v352 = vunpack.c.l.b16 %v313
        %v353 = vunpack.c.h.b16 %v313
        %v354 = vunpack.c.l.b16 %v314
        %v355 = vunpack.c.h.b16 %v314
        %v356 = vunpack.c.l.b16 %v315
        %v357 = vunpack.c.h.b16 %v315
        %v358 = vunpack.c.l.b16 %v316
        %v359 = vunpack.c.h.b16 %v316
        %v360 = vunpack.c.l.b16 %v317
        %v361 = vunpack.c.h.b16 %v317
        %v362 = vunpack.c.l.b16 %v318
        %v363 = vunpack.c.h.b16 %v318
        %v364 = vunpack.c.l.b16 %v319
        %v365 = vunpack.c.h.b16 %v319
        %v366 = vunpack.c.l.b16 %v320
        %v367 = vunpack.c.h.b16 %v320
        %v368 = vunpack.c.l.b16 %v321
        %v369 = vunpack.c.h.b16 %v321
        %v370 = vunpack.c.l.b16 %v322
        %v371 = vunpack.c.h.b16 %v322
        %v372 = vunpack.c.l.b16 %v323
        %v373 = vunpack.c.h.b16 %v323
        %v374 = vunpack.c.l.b16 %v324
        %v375 = vunpack.c.h.b16 %v324
        %v376 = vunpack.c.l.b16 %v325
        %v377 = vunpack.c.h.b16 %v325
        %v378 = vunpack.c.l.b16 %v326
        %v379 = vunpack.c.h.b16 %v326
        %v380 = vunpack.c.l.b16 %v327
        %v381 = vunpack.c.h.b16 %v327
        %v382 = vpack.c.b16 %v352, %v350
        %v383 = vpack.c.b16 %v353, %v351
        %v384 = vpack.c.b16 %v356, %v354
        %v385 = vpack.c.b16 %v357, %v355
        %v386 = vpack.c.b16 %v360, %v358
        %v387 = vpack.c.b16 %v361, %v359
        %v388 = vpack.c.b16 %v364, %v362
        %v389 = vpack.c.b16 %v365, %v363
        %v390 = vpack.c.b16 %v368, %v366
        %v391 = vpack.c.b16 %v369, %v367
        %v392 = vpack.c.b16 %v372, %v370
        %v393 = vpack.c.b16 %v373, %v371
        %v394 = vpack.c.b16 %v376, %v374
        %v395 = vpack.c.b16 %v377, %v375
        %v396 = vpack.c.b16 %v380, %v378
        %v397 = vpack.c.b16 %v381, %v379
        %414 = vmatprep.subr.bf16.mxu0 %v383
        %415 = vmatpush1.bf16.msra.mxu0 %v382
        %416 = vmatprep.subr.bf16.mxu0 %v385
        %417 = vmatpush1.bf16.msra.mxu0 %v384
        %418 = vmatprep.subr.bf16.mxu0 %v387
        %419 = vmatpush1.bf16.msra.mxu0 %v386
        %420 = vmatprep.subr.bf16.mxu0 %v389
        %421 = vmatpush1.bf16.msra.mxu0 %v388
        %422 = vmatprep.subr.bf16.mxu0 %v391
        %423 = vmatpush1.bf16.msra.mxu0 %v390
        %424 = vmatprep.subr.bf16.mxu0 %v393
        %425 = vmatpush1.bf16.msra.mxu0 %v392
        %426 = vmatprep.subr.bf16.mxu0 %v395
        %427 = vmatpush1.bf16.msra.mxu0 %v394
        %428 = vmatprep.subr.bf16.mxu0 %v397
        %429 = vmatpush1.bf16.msra.mxu0 %v396
        %430 = vmatprep.subr.bf16.mxu0 0
        %431 = vmatpush1.bf16.msra.mxu0 0
        %432 = vmatprep.subr.bf16.mxu0 0
        %433 = vmatpush1.bf16.msra.mxu0 0
        %434 = vmatprep.subr.bf16.mxu0 0
        %435 = vmatpush1.bf16.msra.mxu0 0
        %436 = vmatprep.subr.bf16.mxu0 0
        %437 = vmatpush1.bf16.msra.mxu0 0
        %438 = vmatprep.subr.bf16.mxu0 0
        %439 = vmatpush1.bf16.msra.mxu0 0
        %440 = vmatprep.subr.bf16.mxu0 0
        %441 = vmatpush1.bf16.msra.mxu0 0
        %442 = vmatprep.subr.bf16.mxu0 0
        %443 = vmatpush1.bf16.msra.mxu0 0
        %444 = vmatprep.subr.bf16.mxu0 0
        %445 = vmatpush1.bf16.msra.mxu0 0
        %446 = vmatprep.mubr.bf16.mxu0 0
        %447 = vmatmul.mubr.bf16.gmra.mrb[0].mxu0 %v332
        %v448 = vpop.f32.mrb[0].mxu0
        %v449 = vadd.f32 0.0, %v448
        %v450 = vpop.f32.mrb[0].mxu0
        %v451 = vadd.f32 0.0, %v450
        %v452 = vpop.f32.mrb[0].mxu0
        %v453 = vadd.f32 0.0, %v452
        %v454 = vpop.f32.mrb[0].mxu0
        %v455 = vadd.f32 0.0, %v454
        %456 = vdwg.mxu0
        %v457 = vpack.c.bf16 %v453, %v449
        %v458 = vpack.c.bf16 %v455, %v451
        %v475 = vunpack.c.l.b16 %v296
        %v476 = vunpack.c.l.b16 %v297
        %v477 = vunpack.c.l.b16 %v298
        %v478 = vunpack.c.l.b16 %v299
        %v479 = vunpack.c.l.b16 %v300
        %v480 = vunpack.c.l.b16 %v301
        %v481 = vunpack.c.l.b16 %v302
        %v482 = vunpack.c.l.b16 %v303
        %v483 = vunpack.c.l.b16 %v304
        %v484 = vunpack.c.l.b16 %v305
        %v485 = vunpack.c.l.b16 %v306
        %v486 = vunpack.c.l.b16 %v307
        %v487 = vunpack.c.l.b16 %v308
        %v488 = vunpack.c.l.b16 %v309
        %v489 = vunpack.c.l.b16 %v310
        %v490 = vunpack.c.l.b16 %v311
        %v491 = vpack.c.b16 %v476, %v475
        %v492 = vpack.c.b16 %v478, %v477
        %v493 = vpack.c.b16 %v480, %v479
        %v494 = vpack.c.b16 %v482, %v481
        %v495 = vpack.c.b16 %v484, %v483
        %v496 = vpack.c.b16 %v486, %v485
        %v497 = vpack.c.b16 %v488, %v487
        %v498 = vpack.c.b16 %v490, %v489
        %507 = vmatprep.subr.bf16.mxu0 0
        %508 = vmatpush1.bf16.msra.mxu0 %v491
        %509 = vmatprep.subr.bf16.mxu0 0
        %510 = vmatpush1.bf16.msra.mxu0 %v492
        %511 = vmatprep.subr.bf16.mxu0 0
        %512 = vmatpush1.bf16.msra.mxu0 %v493
        %513 = vmatprep.subr.bf16.mxu0 0
        %514 = vmatpush1.bf16.msra.mxu0 %v494
        %515 = vmatprep.subr.bf16.mxu0 0
        %516 = vmatpush1.bf16.msra.mxu0 %v495
        %517 = vmatprep.subr.bf16.mxu0 0
        %518 = vmatpush1.bf16.msra.mxu0 %v496
        %519 = vmatprep.subr.bf16.mxu0 0
        %520 = vmatpush1.bf16.msra.mxu0 %v497
        %521 = vmatprep.subr.bf16.mxu0 0
        %522 = vmatpush1.bf16.msra.mxu0 %v498
        %523 = vmatprep.subr.bf16.mxu0 0
        %524 = vmatpush1.bf16.msra.mxu0 0
        %525 = vmatprep.subr.bf16.mxu0 0
        %526 = vmatpush1.bf16.msra.mxu0 0
        %527 = vmatprep.subr.bf16.mxu0 0
        %528 = vmatpush1.bf16.msra.mxu0 0
        %529 = vmatprep.subr.bf16.mxu0 0
        %530 = vmatpush1.bf16.msra.mxu0 0
        %531 = vmatprep.subr.bf16.mxu0 0
        %532 = vmatpush1.bf16.msra.mxu0 0
        %533 = vmatprep.subr.bf16.mxu0 0
        %534 = vmatpush1.bf16.msra.mxu0 0
        %535 = vmatprep.subr.bf16.mxu0 0
        %536 = vmatpush1.bf16.msra.mxu0 0
        %537 = vmatprep.subr.bf16.mxu0 0
        %538 = vmatpush1.bf16.msra.mxu0 0
        %539 = vmatprep.mubr.bf16.mxu0 0
        %540 = vmatmul.mubr.bf16.gmra.mrb[0].mxu0 %v457
        %v541 = vpop.f32.mrb[0].mxu0
        %v542 = vadd.f32 0.0, %v541
        %v543 = vpop.f32.mrb[0].mxu0
        %v544 = vpop.f32.mrb[0].mxu0
        %v545 = vadd.f32 0.0, %v544
        %v546 = vpop.f32.mrb[0].mxu0
        %547 = vdwg.mxu0
        %548 = vst [vmem:[%s289] sm:$0xff] %v542
        %549 = vst [vmem:[%s289 + $0x8] sm:$0xff] %v545
        %550 = vmatprep.subr.bf16.mxu0 0
        %551 = vmatpush1.bf16.msra.mxu0 %v491
        %552 = vmatprep.subr.bf16.mxu0 0
        %553 = vmatpush1.bf16.msra.mxu0 %v492
        %554 = vmatprep.subr.bf16.mxu0 0
        %555 = vmatpush1.bf16.msra.mxu0 %v493
        %556 = vmatprep.subr.bf16.mxu0 0
        %557 = vmatpush1.bf16.msra.mxu0 %v494
        %558 = vmatprep.subr.bf16.mxu0 0
        %559 = vmatpush1.bf16.msra.mxu0 %v495
        %560 = vmatprep.subr.bf16.mxu0 0
        %561 = vmatpush1.bf16.msra.mxu0 %v496
        %562 = vmatprep.subr.bf16.mxu0 0
        %563 = vmatpush1.bf16.msra.mxu0 %v497
        %564 = vmatprep.subr.bf16.mxu0 0
        %565 = vmatpush1.bf16.msra.mxu0 %v498
        %566 = vmatprep.subr.bf16.mxu0 0
        %567 = vmatpush1.bf16.msra.mxu0 0
        %568 = vmatprep.subr.bf16.mxu0 0
        %569 = vmatpush1.bf16.msra.mxu0 0
        %570 = vmatprep.subr.bf16.mxu0 0
        %571 = vmatpush1.bf16.msra.mxu0 0
        %572 = vmatprep.subr.bf16.mxu0 0
        %573 = vmatpush1.bf16.msra.mxu0 0
        %574 = vmatprep.subr.bf16.mxu0 0
        %575 = vmatpush1.bf16.msra.mxu0 0
        %576 = vmatprep.subr.bf16.mxu0 0
        %577 = vmatpush1.bf16.msra.mxu0 0
        %578 = vmatprep.subr.bf16.mxu0 0
        %579 = vmatpush1.bf16.msra.mxu0 0
        %580 = vmatprep.subr.bf16.mxu0 0
        %581 = vmatpush1.bf16.msra.mxu0 0
        %582 = vmatprep.mubr.bf16.mxu0 0
        %583 = vmatmul.mubr.bf16.gmra.mrb[0].mxu0 %v458
        %v584 = vpop.f32.mrb[0].mxu0
        %v585 = vadd.f32 0.0, %v584
        %v586 = vpop.f32.mrb[0].mxu0
        %v587 = vpop.f32.mrb[0].mxu0
        %v588 = vadd.f32 0.0, %v587
        %v589 = vpop.f32.mrb[0].mxu0
        %590 = vdwg.mxu0
        %s591 = scalar_lea.vmem %s289, 16 [#allocation8]
        %592 = vst [vmem:[%s591] sm:$0xff] %v585
        %593 = vst [vmem:[%s591 + $0x8] sm:$0xff] %v588
        %s594 = sand.u32 %s145, 1
        %s595 = scalar_lea.sflag [#allocation4], %s594
        %s596 = sand.u32 %s145, 1
        %s597 = smul.addr %s596, 32
        %s598 = scalar_lea.vmem [#allocation8], %s597
        // Predicated region
        $region45: #{tpu_custom_call.1} parent=31 // pred_check
          %p599 = pneg %p155
        $region46: #{tpu_custom_call.1} parent=31 // pred_check_branch
          %601 = sbr.rel (%p599) target = $region48
        $region47: #{tpu_custom_call.1} parent=31 // pred_region
          %s602 = smul.u32 2, %s30
          %s603 = smul.u32 2, %s31
          %s605 = ssub.s32 512, 512
          %606 = vsyncadd %s595, %s605
          %s607 = sadd.s32 %s32, %s603
          %s608 = smul.addr %s602, 2
          %s609 = sadd.s32 %s607, %s608
          %s610 = smul.addr %s29, 4
          %s611 = sadd.s32 %s609, %s610
          %s612 = smul.addr %s611, 128
          %s613 = scalar_lea.hbm %s3, %s612
          %s614 = sshll.u32 %s598, 4
          %s615 = int_to_ptr.vmem [resolvable:$true] %s614
          %620 = dma.vmem_to_hbm [thread:$0]  %s615, 512, %s613, %s595, 128, 128, 8
        $region48: #{tpu_custom_call.1} parent=31 // pred_fallthru
          _
      $region32: #{tpu_custom_call.1} parent=5 // pred_fallthru
        _
      %p621 = scmp.le.s32.totalorder 2, %s18
      // Predicated region
      $region49: #{tpu_custom_call.1} parent=5 // pred_check
        %p622 = pneg %p621
      $region50: #{tpu_custom_call.1} parent=5 // pred_check_branch
        %624 = sbr.rel (%p622) target = $region52
      $region51: #{tpu_custom_call.1} parent=5 // pred_region
        %s625 = ssub.s32 %s18, 2
        // Predicated region
        $region53: #{tpu_custom_call.1} parent=51 // pred_check
          %p626 = pneg %p161
        $region54: #{tpu_custom_call.1} parent=51 // pred_check_branch
          %628 = sbr.rel (%p626) target = $region56
        $region55: #{tpu_custom_call.1} parent=51 // pred_region
          %s629 = sand.u32 %s146, 1
          %s630 = scalar_lea.sflag [#allocation4], %s629
          %s631 = sand.u32 %s146, 1
          %s632 = smul.addr %s631, 32
          %s633 = scalar_lea.vmem [#allocation8], %s632
          %634 = dma.done %s630, 512
        $region56: #{tpu_custom_call.1} parent=51 // pred_fallthru
          _
      $region52: #{tpu_custom_call.1} parent=5 // pred_fallthru
        _
    $region6: #{tpu_custom_call.1} parent=1 // loop_footer
      %s22 = sadd.s32 1, %s18
    $region7: #{tpu_custom_call.1} parent=1 // loop_footer_branch
      %17 = sbr.rel target = $region3
    $region8: #{tpu_custom_call.1} parent=1 // loop_exit
      _
    %635 = vsyncpa [#allocation3], 1
    %s636 = scalar_lea.sflag [#allocation3], 1
    %637 = vsyncpa %s636, 1
    %638 = vsyncpa [#allocation6], 1
    %s639 = scalar_lea.sflag [#allocation6], 1
    %640 = vsyncpa %s639, 1
    %641 = vsyncpa [#allocation4], 1
    %s642 = scalar_lea.sflag [#allocation4], 1
    %643 = vsyncpa %s642, 1

</llo_original>
